<compile_context>
chip_gen: v7x
topology: tpu7x:2x2x1
jax: 0.10.0
libtpu: 0.0.40
codegen_flags: <defaults>
</compile_context>

<pallas_src>
import functools
import math

import jax
import jax.numpy as jnp
from jax.experimental import pallas as pl
from jax.experimental.pallas import tpu as pltpu

LANE = 128


def _make_encoder_kernel(in_sizes, row_offsets, compute_dtype):
    """Fused kernel. refs = (x_f32, w_packed, b_packed, out_padded)."""
    num_layers = len(in_sizes)

    def kernel(x_ref, w_ref, b_ref, o_ref):
        # Cast f32 input -> bf16 inside the kernel (hides under the input DMA).
        h = x_ref[...].astype(compute_dtype)      # (tile_b, in0)
        b_all = b_ref[...]                        # (L, pad_w) f32, lane-dense
        for i in range(num_layers):
            off = row_offsets[i]
            in_f = in_sizes[i]
            w = w_ref[off:off + in_f, :]          # static slice of packed weights
            acc = jnp.dot(h, w, preferred_element_type=jnp.float32)  # MXU, f32 acc
            acc = acc + b_all[i:i + 1, :]         # full-width (lane-dense) bias
            h_f32 = jnp.maximum(acc, 0.0)         # ReLU; padded lanes stay 0
            if i + 1 < num_layers:
                h = h_f32.astype(compute_dtype)
            else:
                o_ref[...] = h_f32.astype(o_ref.dtype)

    return kernel


@functools.partial(
    jax.jit,
    static_argnames=("in_sizes", "row_offsets", "out_features", "num_splits"))
def encoder_forward(x, w_packed, b_packed, in_sizes, row_offsets,
                    out_features, num_splits=1):
    """Fused 4x(Linear->ReLU) forward. Returns f32 (batch, out_features)."""
    batch = x.shape[0]
    pad_w = w_packed.shape[1]
    compute_dtype = w_packed.dtype
    kernel = _make_encoder_kernel(in_sizes, row_offsets, compute_dtype)
    vmem = pltpu.MemorySpace.VMEM

    # Zero-pad input features if the first layer's in-dim was padded
    # (no-op / traced away for the standard 256-wide encoder).
    if x.shape[1] != in_sizes[0]:
        x = jnp.pad(x, ((0, 0), (0, in_sizes[0] - x.shape[1])))

    out_padded_shape = jax.ShapeDtypeStruct((batch, pad_w), jnp.float32)

    use_grid = (
        num_splits > 1
        and batch % num_splits == 0
        and (batch // num_splits) % 8 == 0
    )

    if not use_grid:
        # Default (v5e/v6e and small/medium batches): grid-less, everything
        # resident in VMEM, single launch, zero pipeline bookkeeping.
        out_padded = pl.pallas_call(
            kernel,
            out_shape=out_padded_shape,
            in_specs=[pl.BlockSpec(memory_space=vmem)] * 3,
            out_specs=pl.BlockSpec(memory_space=vmem),
        )(x, w_packed, b_packed)
    else:
        # Megacore path (v7x): num_splits=2 -> exactly one grid step per core.
        tile_b = batch // num_splits
        out_padded = pl.pallas_call(
            kernel,
            out_shape=out_padded_shape,
            grid=(num_splits,),
            in_specs=[
                pl.BlockSpec((tile_b, in_sizes[0]), lambda i: (i, 0)),
                pl.BlockSpec(memory_space=vmem),   # weights: grid-invariant
                pl.BlockSpec(memory_space=vmem),   # bias: grid-invariant
            ],
            out_specs=pl.BlockSpec((tile_b, pad_w), lambda i: (i, 0)),
            compiler_params=pltpu.CompilerParams(
                dimension_semantics=("parallel",)),
        )(x, w_packed, b_packed)

    # Lane-dense store inside the kernel; recover the real output width here.
    return out_padded[:, :out_features]


def init_encoder_params(key, layer_sizes, weight_dtype=jnp.bfloat16):
    """PyTorch nn.Linear-style init U(-1/sqrt(fan_in), 1/sqrt(fan_in)).

    Returns:
      w_packed: (sum(in_sizes), pad_w) weight_dtype — all layers, weights
                transposed to (in, out), zero-padded to pad_w lanes and
                concatenated along the row (K) axis.
      b_packed: (num_layers, pad_w) f32 — zero-padded, lane-dense biases.
      meta:     (in_sizes, row_offsets, out_features) static tuples/ints.
      raw:      (ws_f32, bs_f32) unpadded params for the pure-JAX reference.
    """
    in_dims = layer_sizes[:-1]
    out_dims = layer_sizes[1:]
    num_layers = len(out_dims)
    assert max(out_dims) <= LANE, "this packing assumes all layer widths <= 128"

    ws_f32, bs_f32 = [], []
    for in_f, out_f in zip(in_dims, out_dims):
        key, kw, kb = jax.random.split(key, 3)
        bound = 1.0 / math.sqrt(in_f)
        w = jax.random.uniform(kw, (in_f, out_f), jnp.float32, -bound, bound)
        b = jax.random.uniform(kb, (out_f,), jnp.float32, -bound, bound)
        ws_f32.append(w)
        bs_f32.append(b)

    pad_w = LANE
    in0_pad = ((in_dims[0] + 7) // 8) * 8          # first-layer K, sublane-aligned
    in_sizes = tuple([in0_pad] + [pad_w] * (num_layers - 1))
    row_offsets = []
    off = 0
    for s in in_sizes:
        row_offsets.append(off)
        off += s
    row_offsets = tuple(row_offsets)

    padded = []
    for i, (w, in_f, out_f) in enumerate(zip(ws_f32, in_dims, out_dims)):
        wp = jnp.zeros((in_sizes[i], pad_w), jnp.float32)
        wp = wp.at[:in_f, :out_f].set(w)           # zero rows AND cols elsewhere
        padded.append(wp)
    w_packed = jnp.concatenate(padded, axis=0).astype(weight_dtype)
    b_packed = jnp.stack(
        [jnp.pad(b, (0, pad_w - b.shape[0])) for b in bs_f32]
    ).astype(jnp.float32)

    meta = (in_sizes, row_offsets, int(out_dims[-1]))
    return w_packed, b_packed, meta, (ws_f32, bs_f32)


def _reference_forward(x, ws_f32, bs_f32, compute_dtype=jnp.bfloat16):
    """Pure-JAX reference mirroring the kernel's dtype path (bf16 ops, f32 acc)."""
    num_layers = len(ws_f32)
    h = x.astype(compute_dtype)
    for i, (w, b) in enumerate(zip(ws_f32, bs_f32)):
        acc = jnp.dot(h, w.astype(compute_dtype),
                      preferred_element_type=jnp.float32)
        acc = acc + b
        act = jnp.maximum(acc, 0.0)
        h = act.astype(compute_dtype) if i + 1 < num_layers else act
    return h


if __name__ == "__main__":
    # Encoder(bigLayer=256, bigMidLayer=128, midLayer=64,
    #         midSmallLayer=32, smallLayer=16)
    layer_sizes = [256, 128, 64, 32, 16]
    batch = 8

    key = jax.random.PRNGKey(0)
    key, kx = jax.random.split(key)
    x = jax.random.normal(kx, (batch, layer_sizes[0]), jnp.float32)

    w_packed, b_packed, meta, raw = init_encoder_params(key, layer_sizes)
    in_sizes, row_offsets, out_features = meta
    ws_f32, bs_f32 = raw

    # Small-batch path: single fused grid-less kernel (v5e/v6e default).
    out = jax.block_until_ready(
        encoder_forward(x, w_packed, b_packed, in_sizes, row_offsets,
                        out_features))
    assert out.shape == (batch, out_features)
    ref = _reference_forward(x, ws_f32, bs_f32)
    assert jnp.allclose(out, ref, atol=1e-2, rtol=1e-2), float(
        jnp.max(jnp.abs(out - ref)))

    # Megacore path: grid=(2,) "parallel" -> one grid step per TC on v7x.
    key, kx2 = jax.random.split(key)
    x_big = jax.random.normal(kx2, (512, layer_sizes[0]), jnp.float32)
    out_big = jax.block_until_ready(
        encoder_forward(x_big, w_packed, b_packed, in_sizes, row_offsets,
                        out_features, num_splits=2))
    assert out_big.shape == (512, out_features)
    ref_big = _reference_forward(x_big, ws_f32, bs_f32)
    assert jnp.allclose(out_big, ref_big, atol=1e-2, rtol=1e-2), float(
        jnp.max(jnp.abs(out_big - ref_big)))

    print("KERNEL_OK")
</pallas_src>

<mosaic_0001>
module attributes {stable_mosaic.version = 11 : i64} {
  func.func @kernel(%arg0: memref<8x256xf32, #tpu.memory_space<vmem>>, %arg1: memref<640x128xbf16, #tpu.memory_space<vmem>>, %arg2: memref<4x128xf32, #tpu.memory_space<vmem>>, %arg3: memref<8x128xf32, #tpu.memory_space<vmem>>) attributes {dimension_semantics = [], scalar_prefetch = 0 : i64, scratch_operands = 0 : i64, tpu.core_type = #tpu.core_type<tc>} {
    %c0 = arith.constant 0 : index
    %c0_0 = arith.constant 0 : index
    %0 = vector.load %arg0[%c0, %c0_0] : memref<8x256xf32, #tpu.memory_space<vmem>>, vector<8x256xf32>
    %1 = arith.truncf %0 : vector<8x256xf32> to vector<8x256xbf16>
    %c0_1 = arith.constant 0 : index
    %c0_2 = arith.constant 0 : index
    %2 = vector.load %arg2[%c0_1, %c0_2] : memref<4x128xf32, #tpu.memory_space<vmem>>, vector<4x128xf32>
    %c0_3 = arith.constant 0 : index
    %c0_4 = arith.constant 0 : index
    %3 = vector.load %arg1[%c0_3, %c0_4] : memref<640x128xbf16, #tpu.memory_space<vmem>>, vector<256x128xbf16>
    %cst = arith.constant dense<0.000000e+00> : vector<8x128xf32>
    %4 = tpu.matmul %1, %3, %cst {dimension_numbers = #tpu.dot_dimension_numbers<[1], [0], [0], [1], [0, 0, 1, 1], [], []>} : vector<8x256xbf16>, vector<256x128xbf16>, vector<8x128xf32> -> vector<8x128xf32>
    %5 = vector.extract_strided_slice %2 {offsets = [0, 0], sizes = [1, 128], strides = [1, 1]} : vector<4x128xf32> to vector<1x128xf32>
    %6 = vector.broadcast %5 : vector<1x128xf32> to vector<8x128xf32>
    %7 = arith.addf %4, %6 : vector<8x128xf32>
    %cst_5 = arith.constant 0.000000e+00 : f32
    %8 = vector.broadcast %cst_5 : f32 to vector<8x128xf32>
    %9 = arith.maximumf %7, %8 : vector<8x128xf32>
    %10 = arith.truncf %9 : vector<8x128xf32> to vector<8x128xbf16>
    %c256 = arith.constant 256 : index
    %c0_6 = arith.constant 0 : index
    %11 = vector.load %arg1[%c256, %c0_6] : memref<640x128xbf16, #tpu.memory_space<vmem>>, vector<128x128xbf16>
    %cst_7 = arith.constant dense<0.000000e+00> : vector<8x128xf32>
    %12 = tpu.matmul %10, %11, %cst_7 {dimension_numbers = #tpu.dot_dimension_numbers<[1], [0], [0], [1], [0, 0, 1, 1], [], []>} : vector<8x128xbf16>, vector<128x128xbf16>, vector<8x128xf32> -> vector<8x128xf32>
    %13 = vector.extract_strided_slice %2 {offsets = [1, 0], sizes = [1, 128], strides = [1, 1]} : vector<4x128xf32> to vector<1x128xf32>
    %14 = vector.broadcast %13 : vector<1x128xf32> to vector<8x128xf32>
    %15 = arith.addf %12, %14 : vector<8x128xf32>
    %cst_8 = arith.constant 0.000000e+00 : f32
    %16 = vector.broadcast %cst_8 : f32 to vector<8x128xf32>
    %17 = arith.maximumf %15, %16 : vector<8x128xf32>
    %18 = arith.truncf %17 : vector<8x128xf32> to vector<8x128xbf16>
    %c384 = arith.constant 384 : index
    %c0_9 = arith.constant 0 : index
    %19 = vector.load %arg1[%c384, %c0_9] : memref<640x128xbf16, #tpu.memory_space<vmem>>, vector<128x128xbf16>
    %cst_10 = arith.constant dense<0.000000e+00> : vector<8x128xf32>
    %20 = tpu.matmul %18, %19, %cst_10 {dimension_numbers = #tpu.dot_dimension_numbers<[1], [0], [0], [1], [0, 0, 1, 1], [], []>} : vector<8x128xbf16>, vector<128x128xbf16>, vector<8x128xf32> -> vector<8x128xf32>
    %21 = vector.extract_strided_slice %2 {offsets = [2, 0], sizes = [1, 128], strides = [1, 1]} : vector<4x128xf32> to vector<1x128xf32>
    %22 = vector.broadcast %21 : vector<1x128xf32> to vector<8x128xf32>
    %23 = arith.addf %20, %22 : vector<8x128xf32>
    %cst_11 = arith.constant 0.000000e+00 : f32
    %24 = vector.broadcast %cst_11 : f32 to vector<8x128xf32>
    %25 = arith.maximumf %23, %24 : vector<8x128xf32>
    %26 = arith.truncf %25 : vector<8x128xf32> to vector<8x128xbf16>
    %c512 = arith.constant 512 : index
    %c0_12 = arith.constant 0 : index
    %27 = vector.load %arg1[%c512, %c0_12] : memref<640x128xbf16, #tpu.memory_space<vmem>>, vector<128x128xbf16>
    %cst_13 = arith.constant dense<0.000000e+00> : vector<8x128xf32>
    %28 = tpu.matmul %26, %27, %cst_13 {dimension_numbers = #tpu.dot_dimension_numbers<[1], [0], [0], [1], [0, 0, 1, 1], [], []>} : vector<8x128xbf16>, vector<128x128xbf16>, vector<8x128xf32> -> vector<8x128xf32>
    %29 = vector.extract_strided_slice %2 {offsets = [3, 0], sizes = [1, 128], strides = [1, 1]} : vector<4x128xf32> to vector<1x128xf32>
    %30 = vector.broadcast %29 : vector<1x128xf32> to vector<8x128xf32>
    %31 = arith.addf %28, %30 : vector<8x128xf32>
    %cst_14 = arith.constant 0.000000e+00 : f32
    %32 = vector.broadcast %cst_14 : f32 to vector<8x128xf32>
    %33 = arith.maximumf %31, %32 : vector<8x128xf32>
    %c0_15 = arith.constant 0 : index
    %c0_16 = arith.constant 0 : index
    %34 = vector.load %arg3[%c0_15, %c0_16] : memref<8x128xf32, #tpu.memory_space<vmem>>, vector<8x128xf32>
    tpu.vector_store %arg3[%c0_15, %c0_16], %33 {strides = array<i32>} : memref<8x128xf32, #tpu.memory_space<vmem>>, vector<8x128xf32>,
    return
  }
}

</mosaic_0001>

<llo_original>
// kernel: encoder_forward.1
$region0: #{encoder_forward.1}
  #allocation0 [shape = 'u32[]', space=smem, size = 0x4, offset = 0x4, fixed_abs, tag = 'smem constant byte address 0x4 - core index']
  #allocation1 [shape = 'u32[144,128]{1,0:T(1,128)}', space=vmem, size = 0x12000, scoped, tag = 'internal scratch']
  %s0 = inlined_call_operand.hbm [shape: f32[8,256], index: 0, kind: input, shape index: {}]
  %s1 = inlined_call_operand.hbm [shape: bf16[640,128], index: 1, kind: input, shape index: {}]
  %s2 = inlined_call_operand.vmem [shape: f32[4,128], index: 2, kind: input, shape index: {}]
  %s3 = inlined_call_operand.hbm [shape: f32[8,128], index: 3, kind: output, shape index: {}]
  %s4 = sld [smem:[#allocation0]]
  $region30: #{encoder_forward.1} parent=0
    _
  %s6 = ssub.s32 1, %s4
  %s7 = scalar_select 0, %s6, %s4
  $region1: #{encoder_forward.1} parent=0
    #allocation2 [shape = 'u8[8192]{0}', space=vmem, size = 0x2000, scoped, tag = 'input window, operand 0, single buffered']
    #allocation3 [shape = 's32[1]{0}', space=sflag, size = 0x4, scoped, tag = 'scoped memory for encoder_forward.1']
    #allocation4 [shape = 's32[1]{0}', space=sflag, size = 0x4, scoped, tag = 'scoped memory for encoder_forward.1']
    #allocation5 [shape = 'u8[163840]{0}', space=vmem, size = 0x28000, scoped, tag = 'input window, operand 1, single buffered']
    #allocation6 [shape = 's32[1]{0}', space=sflag, size = 0x4, scoped, tag = 'scoped memory for encoder_forward.1']
    #allocation7 [shape = 'u8[4096]{0}', space=vmem, size = 0x1000, scoped, tag = 'output window, operand 0, single buffered']
    %8 = vsyncpa [#allocation3], 0
    %9 = vsyncpa [#allocation6], 0
    %10 = vsyncpa [#allocation4], 0
    // Predicated region
    $region2: #{encoder_forward.1} parent=1 // pred_check
      _
    $region3: #{encoder_forward.1} parent=1 // pred_check_branch
      %12 = sbr.rel (0) target = $region5
    $region4: #{encoder_forward.1} parent=1 // pred_region
      %s14 = ssub.s32 256, 256
      %15 = vsyncadd [#allocation3], %s14
      %s17 = sshll.u32 [#allocation2], 4
      %s18 = int_to_ptr.vmem [resolvable:$true] %s17
      %20 = dma.hbm_to_vmem [thread:$0]  %s0, 256, %s18, [#allocation3]
    $region5: #{encoder_forward.1} parent=1 // pred_fallthru
      _
    // Predicated region
    $region6: #{encoder_forward.1} parent=1 // pred_check
      _
    $region7: #{encoder_forward.1} parent=1 // pred_check_branch
      %22 = sbr.rel (0) target = $region9
    $region8: #{encoder_forward.1} parent=1 // pred_region
      %s24 = ssub.s32 5120, 5120
      %25 = vsyncadd [#allocation6], %s24
      %s26 = sshll.u32 [#allocation5], 4
      %s27 = int_to_ptr.vmem [resolvable:$true] %s26
      %32 = dma.hbm_to_vmem [thread:$0]  %s1, 5120, %s27, [#allocation6], 64, 64, 4
    $region9: #{encoder_forward.1} parent=1 // pred_fallthru
      _
    // Predicated region
    $region10: #{encoder_forward.1} parent=1 // pred_check
      _
    $region11: #{encoder_forward.1} parent=1 // pred_check_branch
      %34 = sbr.rel (0) target = $region13
    $region12: #{encoder_forward.1} parent=1 // pred_region
      _
    $region13: #{encoder_forward.1} parent=1 // pred_fallthru
      _
    // Predicated region
    $region14: #{encoder_forward.1} parent=1 // pred_check
      _
    $region15: #{encoder_forward.1} parent=1 // pred_check_branch
      %36 = sbr.rel (0) target = $region17
    $region16: #{encoder_forward.1} parent=1 // pred_region
      %37 = dma.done [#allocation3], 256
    $region17: #{encoder_forward.1} parent=1 // pred_fallthru
      _
    // Predicated region
    $region18: #{encoder_forward.1} parent=1 // pred_check
      _
    $region19: #{encoder_forward.1} parent=1 // pred_check_branch
      %39 = sbr.rel (0) target = $region21
    $region20: #{encoder_forward.1} parent=1 // pred_region
      %40 = dma.done [#allocation6], 5120
    $region21: #{encoder_forward.1} parent=1 // pred_fallthru
      _
    %v42 = vld [vmem:[#allocation2] sm:$0xff]
    %v43 = vld [vmem:[#allocation2 + $0x8] sm:$0xff]
    %v44 = vpack.c.bf16 %v42, %v42
    %v45 = vpack.c.bf16 %v43, %v43
    %v46 = vld [vmem:[%s2] sm:$0xf]
    %v47 = vld [vmem:[#allocation5] sm:$0xf]
    %v48 = vld [vmem:[#allocation5 + $0x4] sm:$0xf]
    %v49 = vld [vmem:[#allocation5 + $0x8] sm:$0xf]
    %v50 = vld [vmem:[#allocation5 + $0xc] sm:$0xf]
    %v51 = vld [vmem:[#allocation5 + $0x10] sm:$0xf]
    %v52 = vld [vmem:[#allocation5 + $0x14] sm:$0xf]
    %v53 = vld [vmem:[#allocation5 + $0x18] sm:$0xf]
    %v54 = vld [vmem:[#allocation5 + $0x1c] sm:$0xf]
    %v55 = vld [vmem:[#allocation5 + $0x20] sm:$0xf]
    %v56 = vld [vmem:[#allocation5 + $0x24] sm:$0xf]
    %v57 = vld [vmem:[#allocation5 + $0x28] sm:$0xf]
    %v58 = vld [vmem:[#allocation5 + $0x2c] sm:$0xf]
    %v59 = vld [vmem:[#allocation5 + $0x30] sm:$0xf]
    %v60 = vld [vmem:[#allocation5 + $0x34] sm:$0xf]
    %v61 = vld [vmem:[#allocation5 + $0x38] sm:$0xf]
    %v62 = vld [vmem:[#allocation5 + $0x3c] sm:$0xf]
    %v63 = vld [vmem:[#allocation5 + $0x40] sm:$0xf]
    %v64 = vld [vmem:[#allocation5 + $0x44] sm:$0xf]
    %v65 = vld [vmem:[#allocation5 + $0x48] sm:$0xf]
    %v66 = vld [vmem:[#allocation5 + $0x4c] sm:$0xf]
    %v67 = vld [vmem:[#allocation5 + $0x50] sm:$0xf]
    %v68 = vld [vmem:[#allocation5 + $0x54] sm:$0xf]
    %v69 = vld [vmem:[#allocation5 + $0x58] sm:$0xf]
    %v70 = vld [vmem:[#allocation5 + $0x5c] sm:$0xf]
    %v71 = vld [vmem:[#allocation5 + $0x60] sm:$0xf]
    %v72 = vld [vmem:[#allocation5 + $0x64] sm:$0xf]
    %v73 = vld [vmem:[#allocation5 + $0x68] sm:$0xf]
    %v74 = vld [vmem:[#allocation5 + $0x6c] sm:$0xf]
    %v75 = vld [vmem:[#allocation5 + $0x70] sm:$0xf]
    %v76 = vld [vmem:[#allocation5 + $0x74] sm:$0xf]
    %v77 = vld [vmem:[#allocation5 + $0x78] sm:$0xf]
    %v78 = vld [vmem:[#allocation5 + $0x7c] sm:$0xf]
    %v79 = vlaneseq
    %v80 = vshrl.u32 %v79, 7
    %v81 = vsub.s32 0, %v80
    %v82 = vrot.slane %v46, %v81
    %v115 = vunpack.c.l.b16 %v47
    %v116 = vunpack.c.l.b16 %v48
    %v117 = vunpack.c.l.b16 %v49
    %v118 = vunpack.c.l.b16 %v50
    %v119 = vunpack.c.l.b16 %v51
    %v120 = vunpack.c.l.b16 %v52
    %v121 = vunpack.c.l.b16 %v53
    %v122 = vunpack.c.l.b16 %v54
    %v123 = vunpack.c.l.b16 %v55
    %v124 = vunpack.c.l.b16 %v56
    %v125 = vunpack.c.l.b16 %v57
    %v126 = vunpack.c.l.b16 %v58
    %v127 = vunpack.c.l.b16 %v59
    %v128 = vunpack.c.l.b16 %v60
    %v129 = vunpack.c.l.b16 %v61
    %v130 = vunpack.c.l.b16 %v62
    %v131 = vunpack.c.l.b16 %v63
    %v132 = vunpack.c.l.b16 %v64
    %v133 = vunpack.c.l.b16 %v65
    %v134 = vunpack.c.l.b16 %v66
    %v135 = vunpack.c.l.b16 %v67
    %v136 = vunpack.c.l.b16 %v68
    %v137 = vunpack.c.l.b16 %v69
    %v138 = vunpack.c.l.b16 %v70
    %v139 = vunpack.c.l.b16 %v71
    %v140 = vunpack.c.l.b16 %v72
    %v141 = vunpack.c.l.b16 %v73
    %v142 = vunpack.c.l.b16 %v74
    %v143 = vunpack.c.l.b16 %v75
    %v144 = vunpack.c.l.b16 %v76
    %v145 = vunpack.c.l.b16 %v77
    %v146 = vunpack.c.l.b16 %v78
    %v147 = vpack.c.b16 %v116, %v115
    %v148 = vpack.c.b16 %v118, %v117
    %v149 = vpack.c.b16 %v120, %v119
    %v150 = vpack.c.b16 %v122, %v121
    %v151 = vpack.c.b16 %v124, %v123
    %v152 = vpack.c.b16 %v126, %v125
    %v153 = vpack.c.b16 %v128, %v127
    %v154 = vpack.c.b16 %v130, %v129
    %v155 = vpack.c.b16 %v132, %v131
    %v156 = vpack.c.b16 %v134, %v133
    %v157 = vpack.c.b16 %v136, %v135
    %v158 = vpack.c.b16 %v138, %v137
    %v159 = vpack.c.b16 %v140, %v139
    %v160 = vpack.c.b16 %v142, %v141
    %v161 = vpack.c.b16 %v144, %v143
    %v162 = vpack.c.b16 %v146, %v145
    %179 = vmatprep.subr.bf16.mxu0 0
    %180 = vmatpush1.bf16.msra.mxu0 %v147
    %181 = vmatprep.subr.bf16.mxu0 0
    %182 = vmatpush1.bf16.msra.mxu0 %v148
    %183 = vmatprep.subr.bf16.mxu0 0
    %184 = vmatpush1.bf16.msra.mxu0 %v149
    %185 = vmatprep.subr.bf16.mxu0 0
    %186 = vmatpush1.bf16.msra.mxu0 %v150
    %187 = vmatprep.subr.bf16.mxu0 0
    %188 = vmatpush1.bf16.msra.mxu0 %v151
    %189 = vmatprep.subr.bf16.mxu0 0
    %190 = vmatpush1.bf16.msra.mxu0 %v152
    %191 = vmatprep.subr.bf16.mxu0 0
    %192 = vmatpush1.bf16.msra.mxu0 %v153
    %193 = vmatprep.subr.bf16.mxu0 0
    %194 = vmatpush1.bf16.msra.mxu0 %v154
    %195 = vmatprep.subr.bf16.mxu0 0
    %196 = vmatpush1.bf16.msra.mxu0 %v155
    %197 = vmatprep.subr.bf16.mxu0 0
    %198 = vmatpush1.bf16.msra.mxu0 %v156
    %199 = vmatprep.subr.bf16.mxu0 0
    %200 = vmatpush1.bf16.msra.mxu0 %v157
    %201 = vmatprep.subr.bf16.mxu0 0
    %202 = vmatpush1.bf16.msra.mxu0 %v158
    %203 = vmatprep.subr.bf16.mxu0 0
    %204 = vmatpush1.bf16.msra.mxu0 %v159
    %205 = vmatprep.subr.bf16.mxu0 0
    %206 = vmatpush1.bf16.msra.mxu0 %v160
    %207 = vmatprep.subr.bf16.mxu0 0
    %208 = vmatpush1.bf16.msra.mxu0 %v161
    %209 = vmatprep.subr.bf16.mxu0 0
    %210 = vmatpush1.bf16.msra.mxu0 %v162
    %211 = vmatprep.mubr.bf16.mxu0 %v45
    %212 = vmatmul.mubr.bf16.gmra.mrb[0].mxu0 %v44
    %v213 = vpop.f32.mrb[0].mxu0
    %v214 = vadd.f32 %v82, %v213
    %v215 = vpop.f32.mrb[0].mxu0
    %v216 = vpop.f32.mrb[0].mxu0
    %v217 = vpop.f32.mrb[0].mxu0
    %218 = vdwg.mxu0
    %v219 = vmax.f32 %v214, 0.0
    %v220 = vpack.c.bf16 %v219, %v219
    %v221 = vld [vmem:[#allocation5 + $0x80] sm:$0xf]
    %v222 = vld [vmem:[#allocation5 + $0x84] sm:$0xf]
    %v223 = vld [vmem:[#allocation5 + $0x88] sm:$0xf]
    %v224 = vld [vmem:[#allocation5 + $0x8c] sm:$0xf]
    %v225 = vld [vmem:[#allocation5 + $0x90] sm:$0xf]
    %v226 = vld [vmem:[#allocation5 + $0x94] sm:$0xf]
    %v227 = vld [vmem:[#allocation5 + $0x98] sm:$0xf]
    %v228 = vld [vmem:[#allocation5 + $0x9c] sm:$0xf]
    %v229 = vld [vmem:[#allocation5 + $0xa0] sm:$0xf]
    %v230 = vld [vmem:[#allocation5 + $0xa4] sm:$0xf]
    %v231 = vld [vmem:[#allocation5 + $0xa8] sm:$0xf]
    %v232 = vld [vmem:[#allocation5 + $0xac] sm:$0xf]
    %v233 = vld [vmem:[#allocation5 + $0xb0] sm:$0xf]
    %v234 = vld [vmem:[#allocation5 + $0xb4] sm:$0xf]
    %v235 = vld [vmem:[#allocation5 + $0xb8] sm:$0xf]
    %v236 = vld [vmem:[#allocation5 + $0xbc] sm:$0xf]
    %v237 = vlaneseq
    %v238 = vshrl.u32 %v237, 7
    %v239 = vsub.s32 1, %v238
    %v240 = vrot.slane %v46, %v239
    %v257 = vunpack.c.l.b16 %v221
    %v258 = vunpack.c.l.b16 %v222
    %v259 = vunpack.c.l.b16 %v223
    %v260 = vunpack.c.l.b16 %v224
    %v261 = vunpack.c.l.b16 %v225
    %v262 = vunpack.c.l.b16 %v226
    %v263 = vunpack.c.l.b16 %v227
    %v264 = vunpack.c.l.b16 %v228
    %v265 = vunpack.c.l.b16 %v229
    %v266 = vunpack.c.l.b16 %v230
    %v267 = vunpack.c.l.b16 %v231
    %v268 = vunpack.c.l.b16 %v232
    %v269 = vunpack.c.l.b16 %v233
    %v270 = vunpack.c.l.b16 %v234
    %v271 = vunpack.c.l.b16 %v235
    %v272 = vunpack.c.l.b16 %v236
    %v273 = vpack.c.b16 %v258, %v257
    %v274 = vpack.c.b16 %v260, %v259
    %v275 = vpack.c.b16 %v262, %v261
    %v276 = vpack.c.b16 %v264, %v263
    %v277 = vpack.c.b16 %v266, %v265
    %v278 = vpack.c.b16 %v268, %v267
    %v279 = vpack.c.b16 %v270, %v269
    %v280 = vpack.c.b16 %v272, %v271
    %289 = vmatprep.subr.bf16.mxu0 0
    %290 = vmatpush1.bf16.msra.mxu0 %v273
    %291 = vmatprep.subr.bf16.mxu0 0
    %292 = vmatpush1.bf16.msra.mxu0 %v274
    %293 = vmatprep.subr.bf16.mxu0 0
    %294 = vmatpush1.bf16.msra.mxu0 %v275
    %295 = vmatprep.subr.bf16.mxu0 0
    %296 = vmatpush1.bf16.msra.mxu0 %v276
    %297 = vmatprep.subr.bf16.mxu0 0
    %298 = vmatpush1.bf16.msra.mxu0 %v277
    %299 = vmatprep.subr.bf16.mxu0 0
    %300 = vmatpush1.bf16.msra.mxu0 %v278
    %301 = vmatprep.subr.bf16.mxu0 0
    %302 = vmatpush1.bf16.msra.mxu0 %v279
    %303 = vmatprep.subr.bf16.mxu0 0
    %304 = vmatpush1.bf16.msra.mxu0 %v280
    %305 = vmatprep.subr.bf16.mxu0 0
    %306 = vmatpush1.bf16.msra.mxu0 0
    %307 = vmatprep.subr.bf16.mxu0 0
    %308 = vmatpush1.bf16.msra.mxu0 0
    %309 = vmatprep.subr.bf16.mxu0 0
    %310 = vmatpush1.bf16.msra.mxu0 0
    %311 = vmatprep.subr.bf16.mxu0 0
    %312 = vmatpush1.bf16.msra.mxu0 0
    %313 = vmatprep.subr.bf16.mxu0 0
    %314 = vmatpush1.bf16.msra.mxu0 0
    %315 = vmatprep.subr.bf16.mxu0 0
    %316 = vmatpush1.bf16.msra.mxu0 0
    %317 = vmatprep.subr.bf16.mxu0 0
    %318 = vmatpush1.bf16.msra.mxu0 0
    %319 = vmatprep.subr.bf16.mxu0 0
    %320 = vmatpush1.bf16.msra.mxu0 0
    %321 = vmatprep.mubr.bf16.mxu0 0
    %322 = vmatmul.mubr.bf16.gmra.mrb[0].mxu0 %v220
    %v323 = vpop.f32.mrb[0].mxu0
    %v324 = vadd.f32 %v240, %v323
    %v325 = vpop.f32.mrb[0].mxu0
    %v326 = vpop.f32.mrb[0].mxu0
    %v327 = vpop.f32.mrb[0].mxu0
    %328 = vdwg.mxu0
    %v329 = vmax.f32 %v324, 0.0
    %v330 = vpack.c.bf16 %v329, %v329
    %v331 = vld [vmem:[#allocation5 + $0xc0] sm:$0xf]
    %v332 = vld [vmem:[#allocation5 + $0xc4] sm:$0xf]
    %v333 = vld [vmem:[#allocation5 + $0xc8] sm:$0xf]
    %v334 = vld [vmem:[#allocation5 + $0xcc] sm:$0xf]
    %v335 = vld [vmem:[#allocation5 + $0xd0] sm:$0xf]
    %v336 = vld [vmem:[#allocation5 + $0xd4] sm:$0xf]
    %v337 = vld [vmem:[#allocation5 + $0xd8] sm:$0xf]
    %v338 = vld [vmem:[#allocation5 + $0xdc] sm:$0xf]
    %v339 = vld [vmem:[#allocation5 + $0xe0] sm:$0xf]
    %v340 = vld [vmem:[#allocation5 + $0xe4] sm:$0xf]
    %v341 = vld [vmem:[#allocation5 + $0xe8] sm:$0xf]
    %v342 = vld [vmem:[#allocation5 + $0xec] sm:$0xf]
    %v343 = vld [vmem:[#allocation5 + $0xf0] sm:$0xf]
    %v344 = vld [vmem:[#allocation5 + $0xf4] sm:$0xf]
    %v345 = vld [vmem:[#allocation5 + $0xf8] sm:$0xf]
    %v346 = vld [vmem:[#allocation5 + $0xfc] sm:$0xf]
    %v347 = vlaneseq
    %v348 = vshrl.u32 %v347, 7
    %v349 = vsub.s32 2, %v348
    %v350 = vrot.slane %v46, %v349
    %v367 = vunpack.c.l.b16 %v331
    %v368 = vunpack.c.l.b16 %v332
    %v369 = vunpack.c.l.b16 %v333
    %v370 = vunpack.c.l.b16 %v334
    %v371 = vunpack.c.l.b16 %v335
    %v372 = vunpack.c.l.b16 %v336
    %v373 = vunpack.c.l.b16 %v337
    %v374 = vunpack.c.l.b16 %v338
    %v375 = vunpack.c.l.b16 %v339
    %v376 = vunpack.c.l.b16 %v340
    %v377 = vunpack.c.l.b16 %v341
    %v378 = vunpack.c.l.b16 %v342
    %v379 = vunpack.c.l.b16 %v343
    %v380 = vunpack.c.l.b16 %v344
    %v381 = vunpack.c.l.b16 %v345
    %v382 = vunpack.c.l.b16 %v346
    %v383 = vpack.c.b16 %v368, %v367
    %v384 = vpack.c.b16 %v370, %v369
    %v385 = vpack.c.b16 %v372, %v371
    %v386 = vpack.c.b16 %v374, %v373
    %v387 = vpack.c.b16 %v376, %v375
    %v388 = vpack.c.b16 %v378, %v377
    %v389 = vpack.c.b16 %v380, %v379
    %v390 = vpack.c.b16 %v382, %v381
    %399 = vmatprep.subr.bf16.mxu0 0
    %400 = vmatpush1.bf16.msra.mxu0 %v383
    %401 = vmatprep.subr.bf16.mxu0 0
    %402 = vmatpush1.bf16.msra.mxu0 %v384
    %403 = vmatprep.subr.bf16.mxu0 0
    %404 = vmatpush1.bf16.msra.mxu0 %v385
    %405 = vmatprep.subr.bf16.mxu0 0
    %406 = vmatpush1.bf16.msra.mxu0 %v386
    %407 = vmatprep.subr.bf16.mxu0 0
    %408 = vmatpush1.bf16.msra.mxu0 %v387
    %409 = vmatprep.subr.bf16.mxu0 0
    %410 = vmatpush1.bf16.msra.mxu0 %v388
    %411 = vmatprep.subr.bf16.mxu0 0
    %412 = vmatpush1.bf16.msra.mxu0 %v389
    %413 = vmatprep.subr.bf16.mxu0 0
    %414 = vmatpush1.bf16.msra.mxu0 %v390
    %415 = vmatprep.subr.bf16.mxu0 0
    %416 = vmatpush1.bf16.msra.mxu0 0
    %417 = vmatprep.subr.bf16.mxu0 0
    %418 = vmatpush1.bf16.msra.mxu0 0
    %419 = vmatprep.subr.bf16.mxu0 0
    %420 = vmatpush1.bf16.msra.mxu0 0
    %421 = vmatprep.subr.bf16.mxu0 0
    %422 = vmatpush1.bf16.msra.mxu0 0
    %423 = vmatprep.subr.bf16.mxu0 0
    %424 = vmatpush1.bf16.msra.mxu0 0
    %425 = vmatprep.subr.bf16.mxu0 0
    %426 = vmatpush1.bf16.msra.mxu0 0
    %427 = vmatprep.subr.bf16.mxu0 0
    %428 = vmatpush1.bf16.msra.mxu0 0
    %429 = vmatprep.subr.bf16.mxu0 0
    %430 = vmatpush1.bf16.msra.mxu0 0
    %431 = vmatprep.mubr.bf16.mxu0 0
    %432 = vmatmul.mubr.bf16.gmra.mrb[0].mxu0 %v330
    %v433 = vpop.f32.mrb[0].mxu0
    %v434 = vadd.f32 %v350, %v433
    %v435 = vpop.f32.mrb[0].mxu0
    %v436 = vpop.f32.mrb[0].mxu0
    %v437 = vpop.f32.mrb[0].mxu0
    %438 = vdwg.mxu0
    %v439 = vmax.f32 %v434, 0.0
    %v440 = vpack.c.bf16 %v439, %v439
    %v441 = vld [vmem:[#allocation5 + $0x100] sm:$0xf]
    %v442 = vld [vmem:[#allocation5 + $0x104] sm:$0xf]
    %v443 = vld [vmem:[#allocation5 + $0x108] sm:$0xf]
    %v444 = vld [vmem:[#allocation5 + $0x10c] sm:$0xf]
    %v445 = vld [vmem:[#allocation5 + $0x110] sm:$0xf]
    %v446 = vld [vmem:[#allocation5 + $0x114] sm:$0xf]
    %v447 = vld [vmem:[#allocation5 + $0x118] sm:$0xf]
    %v448 = vld [vmem:[#allocation5 + $0x11c] sm:$0xf]
    %v449 = vld [vmem:[#allocation5 + $0x120] sm:$0xf]
    %v450 = vld [vmem:[#allocation5 + $0x124] sm:$0xf]
    %v451 = vld [vmem:[#allocation5 + $0x128] sm:$0xf]
    %v452 = vld [vmem:[#allocation5 + $0x12c] sm:$0xf]
    %v453 = vld [vmem:[#allocation5 + $0x130] sm:$0xf]
    %v454 = vld [vmem:[#allocation5 + $0x134] sm:$0xf]
    %v455 = vld [vmem:[#allocation5 + $0x138] sm:$0xf]
    %v456 = vld [vmem:[#allocation5 + $0x13c] sm:$0xf]
    %v457 = vlaneseq
    %v458 = vshrl.u32 %v457, 7
    %v459 = vsub.s32 3, %v458
    %v460 = vrot.slane %v46, %v459
    %v477 = vunpack.c.l.b16 %v441
    %v478 = vunpack.c.l.b16 %v442
    %v479 = vunpack.c.l.b16 %v443
    %v480 = vunpack.c.l.b16 %v444
    %v481 = vunpack.c.l.b16 %v445
    %v482 = vunpack.c.l.b16 %v446
    %v483 = vunpack.c.l.b16 %v447
    %v484 = vunpack.c.l.b16 %v448
    %v485 = vunpack.c.l.b16 %v449
    %v486 = vunpack.c.l.b16 %v450
    %v487 = vunpack.c.l.b16 %v451
    %v488 = vunpack.c.l.b16 %v452
    %v489 = vunpack.c.l.b16 %v453
    %v490 = vunpack.c.l.b16 %v454
    %v491 = vunpack.c.l.b16 %v455
    %v492 = vunpack.c.l.b16 %v456
    %v493 = vpack.c.b16 %v478, %v477
    %v494 = vpack.c.b16 %v480, %v479
    %v495 = vpack.c.b16 %v482, %v481
    %v496 = vpack.c.b16 %v484, %v483
    %v497 = vpack.c.b16 %v486, %v485
    %v498 = vpack.c.b16 %v488, %v487
    %v499 = vpack.c.b16 %v490, %v489
    %v500 = vpack.c.b16 %v492, %v491
    %509 = vmatprep.subr.bf16.mxu0 0
    %510 = vmatpush1.bf16.msra.mxu0 %v493
    %511 = vmatprep.subr.bf16.mxu0 0
    %512 = vmatpush1.bf16.msra.mxu0 %v494
    %513 = vmatprep.subr.bf16.mxu0 0
    %514 = vmatpush1.bf16.msra.mxu0 %v495
    %515 = vmatprep.subr.bf16.mxu0 0
    %516 = vmatpush1.bf16.msra.mxu0 %v496
    %517 = vmatprep.subr.bf16.mxu0 0
    %518 = vmatpush1.bf16.msra.mxu0 %v497
    %519 = vmatprep.subr.bf16.mxu0 0
    %520 = vmatpush1.bf16.msra.mxu0 %v498
    %521 = vmatprep.subr.bf16.mxu0 0
    %522 = vmatpush1.bf16.msra.mxu0 %v499
    %523 = vmatprep.subr.bf16.mxu0 0
    %524 = vmatpush1.bf16.msra.mxu0 %v500
    %525 = vmatprep.subr.bf16.mxu0 0
    %526 = vmatpush1.bf16.msra.mxu0 0
    %527 = vmatprep.subr.bf16.mxu0 0
    %528 = vmatpush1.bf16.msra.mxu0 0
    %529 = vmatprep.subr.bf16.mxu0 0
    %530 = vmatpush1.bf16.msra.mxu0 0
    %531 = vmatprep.subr.bf16.mxu0 0
    %532 = vmatpush1.bf16.msra.mxu0 0
    %533 = vmatprep.subr.bf16.mxu0 0
    %534 = vmatpush1.bf16.msra.mxu0 0
    %535 = vmatprep.subr.bf16.mxu0 0
    %536 = vmatpush1.bf16.msra.mxu0 0
    %537 = vmatprep.subr.bf16.mxu0 0
    %538 = vmatpush1.bf16.msra.mxu0 0
    %539 = vmatprep.subr.bf16.mxu0 0
    %540 = vmatpush1.bf16.msra.mxu0 0
    %541 = vmatprep.mubr.bf16.mxu0 0
    %542 = vmatmul.mubr.bf16.gmra.mrb[0].mxu0 %v440
    %v543 = vpop.f32.mrb[0].mxu0
    %v544 = vadd.f32 %v460, %v543
    %v545 = vpop.f32.mrb[0].mxu0
    %v546 = vpop.f32.mrb[0].mxu0
    %v547 = vpop.f32.mrb[0].mxu0
    %548 = vdwg.mxu0
    %v549 = vmax.f32 %v544, 0.0
    %550 = vst [vmem:[#allocation7] sm:$0xff] %v549
    // Predicated region
    $region22: #{encoder_forward.1} parent=1 // pred_check
      _
    $region23: #{encoder_forward.1} parent=1 // pred_check_branch
      %552 = sbr.rel (0) target = $region25
    $region24: #{encoder_forward.1} parent=1 // pred_region
      %s554 = ssub.s32 128, 128
      %555 = vsyncadd [#allocation4], %s554
      %s557 = sshll.u32 [#allocation7], 4
      %s558 = int_to_ptr.vmem [resolvable:$true] %s557
      %560 = dma.vmem_to_hbm [thread:$0]  %s558, 128, %s3, [#allocation4]
    $region25: #{encoder_forward.1} parent=1 // pred_fallthru
      _
    // Predicated region
    $region26: #{encoder_forward.1} parent=1 // pred_check
      _
    $region27: #{encoder_forward.1} parent=1 // pred_check_branch
      %562 = sbr.rel (0) target = $region29
    $region28: #{encoder_forward.1} parent=1 // pred_region
      %563 = dma.done [#allocation4], 128
    $region29: #{encoder_forward.1} parent=1 // pred_fallthru
      _
    %564 = vsyncpa [#allocation3], 1
    %565 = vsyncpa [#allocation6], 1
    %566 = vsyncpa [#allocation4], 1

</llo_original>
